<compile_context>
chip_gen: v6e
topology: v6e:2x2x1
jax: 0.10.0
libtpu: 0.0.40
codegen_flags: <defaults>
</compile_context>

<pallas_src>
import functools

import jax
import jax.numpy as jnp
from jax.experimental import pallas as pl
from jax.experimental.pallas import tpu as pltpu


def _se3_dropout_kernel(bits_ref, x_ref, o_ref, *, threshold):
    # bits_ref: int32 uniforms in [0, 2**31); keep iff bits >= threshold (prob. 1 - p).
    keep = bits_ref[...] >= threshold
    o_ref[...] = jnp.where(keep, x_ref[...], jnp.zeros((), o_ref.dtype))


def _largest_divisor_multiple(n, quantum, cap):
    """Largest divisor of n that is a multiple of `quantum` and <= cap.

    Assumes n % quantum == 0; always returns at least `quantum`.
    """
    best = quantum
    d = quantum
    limit = min(n, max(cap, quantum))
    while d <= limit:
        if n % d == 0:
            best = d
        d += quantum
    return best


def se3_dropout(x, key, *, p=0.5, num_channels=4, training=True, block_bytes=1 << 20):
    """x: (B, C, M, H, W, D) float array. Returns same shape/dtype (no 1/(1-p) rescale)."""
    if p < 0 or p > 1:
        raise ValueError(f"Dropout probability has to be between 0 and 1, but got {p}")
    if not training or p == 0:
        return x
    B, C, M, H, W, D = x.shape
    assert C == num_channels, f"expected {num_channels} channels, got {C}"
    if p >= 1:
        return jnp.zeros_like(x)

    R, S = B * C, H * W * D

    # Per-(b, c, spatial) 31-bit uniforms; "rand > p"  ==  "bits >= p * 2**31".
    bits = (jax.random.bits(key, (R, S), jnp.uint32) >> 1).astype(jnp.int32)
    threshold = min(int(round(p * (1 << 31))), (1 << 31) - 1)
    kernel = functools.partial(_se3_dropout_kernel, threshold=threshold)
    cost = pl.CostEstimate(
        flops=x.size,
        transcendentals=0,
        bytes_accessed=2 * x.size * x.dtype.itemsize + bits.size * 4,
    )
    # Budget block sizes against 4-byte elements (f32 x / int32 bits).
    max_block_elems = max(block_bytes // 4, 1024)

    if S % 128 == 0:
        # Dense path: fold the irrep dim M into the lane axis.
        r_quantum = 8 if R % 8 == 0 else R
        c_tile = _largest_divisor_multiple(S, 128, max_block_elems // r_quantum)
        r_tile = _largest_divisor_multiple(R, r_quantum, max_block_elems // c_tile)
        num_s = S // c_tile
        grid = (R // r_tile, num_s, M)
        xr = x.reshape(R, M * S)
        out = pl.pallas_call(
            kernel,
            out_shape=jax.ShapeDtypeStruct((R, M * S), x.dtype),
            grid=grid,
            in_specs=[
                # Same bits tile for every m -> stays resident in VMEM across the
                # innermost (m) grid axis; fetched once per (row, spatial) tile.
                pl.BlockSpec((r_tile, c_tile), lambda r, s, m: (r, s)),
                pl.BlockSpec((r_tile, c_tile), lambda r, s, m: (r, m * num_s + s)),
            ],
            out_specs=pl.BlockSpec((r_tile, c_tile), lambda r, s, m: (r, m * num_s + s)),
            compiler_params=pltpu.CompilerParams(
                dimension_semantics=("parallel", "parallel", "arbitrary")),
            cost_estimate=cost,
        )(bits, xr)
        return out.reshape(x.shape)

    # Fallback (S not a multiple of 128): full-(M, S) blocks — last two block dims
    # equal the array dims, so the layout is always legal; the mask broadcasts over M
    # inside the kernel.
    r_quantum = 8 if R % 8 == 0 else R
    r_tile = _largest_divisor_multiple(R, r_quantum, max_block_elems // max(M * S, 1))
    out = pl.pallas_call(
        kernel,
        out_shape=jax.ShapeDtypeStruct((R, M, S), x.dtype),
        grid=(R // r_tile,),
        in_specs=[
            pl.BlockSpec((r_tile, 1, S), lambda r: (r, 0, 0)),
            pl.BlockSpec((r_tile, M, S), lambda r: (r, 0, 0)),
        ],
        out_specs=pl.BlockSpec((r_tile, M, S), lambda r: (r, 0, 0)),
        compiler_params=pltpu.CompilerParams(dimension_semantics=("parallel",)),
        cost_estimate=cost,
    )(bits.reshape(R, 1, S), x.reshape(R, M, S))
    return out.reshape(x.shape)


if __name__ == "__main__":
    key = jax.random.PRNGKey(0)
    xkey, mkey = jax.random.split(key)
    B, C, M, H, W, D = 2, 4, 3, 8, 8, 8          # C = num_channels, M = 2l+1 (l=1)
    x = jax.random.normal(xkey, (B, C, M, H, W, D), dtype=jnp.float32)

    y = se3_dropout(x, mkey, p=0.5, num_channels=C, training=True)
    y = jax.block_until_ready(y)

    # Sanity checks on the dropout semantics.
    assert y.shape == x.shape and y.dtype == x.dtype
    # Every element is either kept verbatim or zeroed (no 1/(1-p) rescale).
    assert bool(jnp.all((y == x) | (y == 0)))
    # The mask is shared across the irrep dimension M (SE(3) equivariance).
    dropped = (y == 0) & (x != 0)
    assert bool(jnp.all(dropped == dropped[:, :, :1]))
    # Keep fraction is ~ 1 - p.
    keep_frac = float(1.0 - jnp.mean(dropped[:, :, 0].astype(jnp.float32)))
    assert 0.35 < keep_frac < 0.65, keep_frac
    # Eval mode / p == 0 are identity passthrough.
    assert se3_dropout(x, mkey, p=0.5, num_channels=C, training=False) is x

    print("KERNEL_OK")
</pallas_src>

<mosaic_0001>
module attributes {stable_mosaic.version = 11 : i64} {
  func.func @_se3_dropout_kernel(%arg0: i32, %arg1: i32, %arg2: i32, %arg3: memref<8x512xi32, #tpu.memory_space<vmem>>, %arg4: memref<8x512xf32, #tpu.memory_space<vmem>>, %arg5: memref<8x512xf32, #tpu.memory_space<vmem>>) attributes {dimension_semantics = [#tpu.dimension_semantics<parallel>, #tpu.dimension_semantics<parallel>, #tpu.dimension_semantics<arbitrary>], iteration_bounds = array<i64: 1, 1, 3>, scalar_prefetch = 0 : i64, scratch_operands = 0 : i64, tpu.core_type = #tpu.core_type<tc>, window_params = [{transform_indices = @transform_0, window_bounds = array<i64: 8, 512>}, {transform_indices = @transform_1, window_bounds = array<i64: 8, 512>}, {transform_indices = @transform_2, window_bounds = array<i64: 8, 512>}]} {
    %c0 = arith.constant 0 : index
    %c0_0 = arith.constant 0 : index
    %0 = vector.load %arg3[%c0, %c0_0] : memref<8x512xi32, #tpu.memory_space<vmem>>, vector<8x512xi32>
    %c1073741824_i32 = arith.constant 1073741824 : i32
    %1 = vector.broadcast %c1073741824_i32 : i32 to vector<8x512xi32>
    %2 = arith.cmpi sge, %0, %1 : vector<8x512xi32>
    %c0_1 = arith.constant 0 : index
    %c0_2 = arith.constant 0 : index
    %3 = vector.load %arg4[%c0_1, %c0_2] : memref<8x512xf32, #tpu.memory_space<vmem>>, vector<8x512xf32>
    %cst = arith.constant 0.000000e+00 : f32
    %4 = vector.broadcast %cst : f32 to vector<8x512xf32>
    %5 = arith.select %2, %3, %4 : vector<8x512xi1>, vector<8x512xf32>
    %c0_3 = arith.constant 0 : index
    %c0_4 = arith.constant 0 : index
    %6 = vector.load %arg5[%c0_3, %c0_4] : memref<8x512xf32, #tpu.memory_space<vmem>>, vector<8x512xf32>
    tpu.vector_store %arg5[%c0_3, %c0_4], %5 {strides = array<i32>} : memref<8x512xf32, #tpu.memory_space<vmem>>, vector<8x512xf32>,
    return
  }
  func.func @transform_0(%arg0: i32, %arg1: i32, %arg2: i32) -> (i32, i32) {
    %c0_i32 = arith.constant 0 : i32
    return %arg0, %arg1 : i32, i32
  }
  func.func @transform_1(%arg0: i32, %arg1: i32, %arg2: i32) -> (i32, i32) {
    %c1_i32 = arith.constant 1 : i32
    %0 = arith.muli %arg2, %c1_i32 : i32
    %1 = arith.addi %0, %arg1 : i32
    %c0_i32 = arith.constant 0 : i32
    return %arg0, %1 : i32, i32
  }
  func.func @transform_2(%arg0: i32, %arg1: i32, %arg2: i32) -> (i32, i32) {
    %c1_i32 = arith.constant 1 : i32
    %0 = arith.muli %arg2, %c1_i32 : i32
    %1 = arith.addi %0, %arg1 : i32
    %c0_i32 = arith.constant 0 : i32
    return %arg0, %1 : i32, i32
  }
}

</mosaic_0001>

<llo_original>
// kernel: tpu_custom_call.1
$region0: #{tpu_custom_call.1}
  #allocation0 [shape = 'u32[]', space=smem, size = 0x4, offset = 0x4, fixed_abs, tag = 'smem constant byte address 0x4 - core index']
  #allocation1 [shape = 'u32[144,128]{1,0:T(1,128)}', space=vmem, size = 0x12000, scoped, tag = 'internal scratch']
  %s0 = inlined_call_operand.hbm [shape: s32[8,512], index: 0, kind: input, shape index: {}]
  %s1 = inlined_call_operand.hbm [shape: f32[8,1536], index: 1, kind: input, shape index: {}]
  %s2 = inlined_call_operand.hbm [shape: f32[8,1536], index: 2, kind: output, shape index: {}]
  %s3 = sld [smem:[#allocation0]]
  $region49: #{tpu_custom_call.1} parent=0
    _
  %s5 = ssub.s32 1, %s3
  %s6 = scalar_select 0, %s5, %s3
  $region1: #{tpu_custom_call.1} parent=0
    #allocation2 [shape = 'u8[16384]{0}', space=vmem, size = 0x4000, scoped, tag = 'input window, operand 0, single buffered']
    #allocation3 [shape = 's32[2]{0}', space=sflag, size = 0x8, scoped, tag = 'scoped memory for tpu_custom_call.1']
    #allocation4 [shape = 's32[2]{0}', space=sflag, size = 0x8, scoped, tag = 'scoped memory for tpu_custom_call.1']
    #allocation5 [shape = 'u8[32768]{0}', space=vmem, size = 0x8000, scoped, tag = 'input window, operand 1']
    #allocation6 [shape = 's32[2]{0}', space=sflag, size = 0x8, scoped, tag = 'scoped memory for tpu_custom_call.1']
    #allocation7 [shape = 'u8[32768]{0}', space=vmem, size = 0x8000, scoped, tag = 'output window, operand 0']
    %7 = vsyncpa [#allocation3], 0
    %8 = vsyncpa [#allocation6], 0
    %s9 = scalar_lea.sflag [#allocation6], 1
    %10 = vsyncpa %s9, 0
    %11 = vsyncpa [#allocation4], 0
    %s12 = scalar_lea.sflag [#allocation4], 1
    %13 = vsyncpa %s12, 0
    loop: start=0, step=1, limit=5
    $region2: #{tpu_custom_call.1} parent=1 // loop_pre_header
      _
    $region3: #{tpu_custom_call.1} parent=1 // loop_header
      %s15 = sphi 0, %s19
      %p16 = scmp.ge.s32.totalorder %s15, 5
      %s22 = sphi 0, %s41
      %s23 = sphi 0, %s37
      %s24 = sphi 0, %s33
      %s25 = sphi 0, %s22
      %s26 = sphi 0, %s23
      %s27 = sphi 0, %s24
      %s28 = sphi 0, %s25
      %s29 = sphi 0, %s26
      %s30 = sphi 0, %s27
      %s46 = sphi 0, %s48
      %s49 = sphi 0, %s46
      %s50 = sphi 0, %s49
      %s66 = sphi 0, %s50
      %s76 = sphi 0, %s78
      %s79 = sphi 0, %s76
      %s80 = sphi 0, %s79
      %s96 = sphi 0, %s80
      %s106 = sphi 0, %s108
      %s109 = sphi 0, %s106
      %s110 = sphi 0, %s109
      %s126 = sphi 0, %s110
    $region4: #{tpu_custom_call.1} parent=1 // loop_header_branch
      %18 = sbr.rel (%p16) target = $region8
    $region5: #{tpu_custom_call.1} parent=1 // loop_body
      %s20 = ssub.s32 %s15, 1
      %s21 = ssub.s32 %s15, 2
      %s31 = sadd.s32 1, %s24
      %p32 = scmp.ge.s32.totalorder %s31, 3
      %s33 = scalar_select %p32, 0, %s31
      %s34 = sadd.s32 1, %s23
      %s35 = scalar_select %p32, %s34, %s23
      %p36 = scmp.ge.s32.totalorder %s35, 1
      %s37 = scalar_select %p36, 0, %s35
      %s38 = sadd.s32 1, %s22
      %s39 = scalar_select %p36, %s38, %s22
      %p40 = scmp.ge.s32.totalorder %s39, 1
      %s41 = scalar_select %p40, 0, %s39
      %s42 = ssub.s32 %s22, %s41
      %s43 = ssub.s32 %s23, %s37
      %s44 = sor.u32 %s42, %s43
      %p45 = scmp.eq.s32.totalorder %s44, 0
      %s47 = sadd.s32 %s46, 1
      %s48 = scalar_select %p45, %s46, %s47
      %p51 = pneg %p45
      %p52 = scmp.eq.s32.totalorder %s15, 2
      %p53 = por %p51, %p52
      %p54 = scmp.ne.s32.totalorder %s46, %s49
      %p55 = scmp.eq.s32.totalorder %s15, 0
      %p56 = por %p54, %p55
      %p57 = scmp.ne.s32.totalorder %s46, %s49
      %p58 = scmp.eq.s32.totalorder %s20, 2
      %p59 = por %p57, %p58
      %p60 = scmp.ne.s32.totalorder %s49, %s50
      %p61 = scmp.eq.s32.totalorder %s20, 0
      %p62 = por %p60, %p61
      %p63 = scmp.ne.s32.totalorder %s49, %s50
      %p64 = scmp.eq.s32.totalorder %s21, 2
      %p65 = por %p63, %p64
      %p67 = scmp.ne.s32.totalorder %s50, %s66
      %p68 = scmp.eq.s32.totalorder %s21, 0
      %p69 = por %p67, %p68
      %s70 = sadd.s32 %s24, %s23
      %s71 = sadd.s32 %s33, %s37
      %s72 = ssub.s32 %s22, %s41
      %s73 = ssub.s32 %s70, %s71
      %s74 = sor.u32 %s72, %s73
      %p75 = scmp.eq.s32.totalorder %s74, 0
      %s77 = sadd.s32 %s76, 1
      %s78 = scalar_select %p75, %s76, %s77
      %p81 = pneg %p75
      %p82 = scmp.eq.s32.totalorder %s15, 2
      %p83 = por %p81, %p82
      %p84 = scmp.ne.s32.totalorder %s76, %s79
      %p85 = scmp.eq.s32.totalorder %s15, 0
      %p86 = por %p84, %p85
      %p87 = scmp.ne.s32.totalorder %s76, %s79
      %p88 = scmp.eq.s32.totalorder %s20, 2
      %p89 = por %p87, %p88
      %p90 = scmp.ne.s32.totalorder %s79, %s80
      %p91 = scmp.eq.s32.totalorder %s20, 0
      %p92 = por %p90, %p91
      %p93 = scmp.ne.s32.totalorder %s79, %s80
      %p94 = scmp.eq.s32.totalorder %s21, 2
      %p95 = por %p93, %p94
      %p97 = scmp.ne.s32.totalorder %s80, %s96
      %p98 = scmp.eq.s32.totalorder %s21, 0
      %p99 = por %p97, %p98
      %s100 = sadd.s32 %s24, %s23
      %s101 = sadd.s32 %s33, %s37
      %s102 = ssub.s32 %s22, %s41
      %s103 = ssub.s32 %s100, %s101
      %s104 = sor.u32 %s102, %s103
      %p105 = scmp.eq.s32.totalorder %s104, 0
      %s107 = sadd.s32 %s106, 1
      %s108 = scalar_select %p105, %s106, %s107
      %p111 = pneg %p105
      %p112 = scmp.eq.s32.totalorder %s15, 2
      %p113 = por %p111, %p112
      %p114 = scmp.ne.s32.totalorder %s106, %s109
      %p115 = scmp.eq.s32.totalorder %s15, 0
      %p116 = por %p114, %p115
      %p117 = scmp.ne.s32.totalorder %s106, %s109
      %p118 = scmp.eq.s32.totalorder %s20, 2
      %p119 = por %p117, %p118
      %p120 = scmp.ne.s32.totalorder %s109, %s110
      %p121 = scmp.eq.s32.totalorder %s20, 0
      %p122 = por %p120, %p121
      %p123 = scmp.ne.s32.totalorder %s109, %s110
      %p124 = scmp.eq.s32.totalorder %s21, 2
      %p125 = por %p123, %p124
      %p127 = scmp.ne.s32.totalorder %s110, %s126
      %p128 = scmp.eq.s32.totalorder %s21, 0
      %p129 = por %p127, %p128
      %p130 = scmp.le.s32.totalorder 1, %s15
      %p131 = scmp.lt.s32.totalorder %s15, 4
      %p132 = pnand %p130, %p131
      %p133 = pneg %p132
      // Predicated region
      $region9: #{tpu_custom_call.1} parent=5 // pred_check
        _
      $region10: #{tpu_custom_call.1} parent=5 // pred_check_branch
        %135 = sbr.rel (%p132) target = $region12
      $region11: #{tpu_custom_call.1} parent=5 // pred_region
        %s136 = ssub.s32 %s15, 1
        // Predicated region
        $region13: #{tpu_custom_call.1} parent=11 // pred_check
          %p137 = pneg %p62
        $region14: #{tpu_custom_call.1} parent=11 // pred_check_branch
          %139 = sbr.rel (%p137) target = $region16
        $region15: #{tpu_custom_call.1} parent=11 // pred_region
          %s140 = smul.u32 4, %s26
          %s142 = ssub.s32 512, 512
          %143 = vsyncadd [#allocation3], %s142
          %s144 = smul.addr %s25, 4
          %s145 = sadd.s32 %s140, %s144
          %s146 = smul.addr %s145, 128
          %s147 = scalar_lea.hbm %s0, %s146
          %s149 = sshll.u32 [#allocation2], 4
          %s150 = int_to_ptr.vmem [resolvable:$true] %s149
          %152 = dma.hbm_to_vmem [thread:$0]  %s147, 512, %s150, [#allocation3]
        $region16: #{tpu_custom_call.1} parent=11 // pred_fallthru
          _
      $region12: #{tpu_custom_call.1} parent=5 // pred_fallthru
        _
      %p153 = scmp.lt.s32.totalorder %s15, 3
      // Predicated region
      $region17: #{tpu_custom_call.1} parent=5 // pred_check
        %p154 = pneg %p153
      $region18: #{tpu_custom_call.1} parent=5 // pred_check_branch
        %156 = sbr.rel (%p154) target = $region20
      $region19: #{tpu_custom_call.1} parent=5 // pred_region
        // Predicated region
        $region21: #{tpu_custom_call.1} parent=19 // pred_check
          %p157 = pneg %p86
        $region22: #{tpu_custom_call.1} parent=19 // pred_check_branch
          %159 = sbr.rel (%p157) target = $region24
        $region23: #{tpu_custom_call.1} parent=19 // pred_region
          %s160 = sand.u32 %s76, 1
          %s161 = scalar_lea.sflag [#allocation6], %s160
          %s162 = sand.u32 %s76, 1
          %s163 = smul.addr %s162, 32
          %s164 = scalar_lea.vmem [#allocation5], %s163
          %s165 = sadd.s32 %s24, %s23
          %s166 = smul.u32 4, %s165
          %s168 = ssub.s32 512, 512
          %169 = vsyncadd %s161, %s168
          %s170 = smul.addr %s22, 12
          %s171 = sadd.s32 %s166, %s170
          %s172 = smul.addr %s171, 128
          %s173 = scalar_lea.hbm %s1, %s172
          %s175 = sshll.u32 %s164, 4
          %s176 = int_to_ptr.vmem [resolvable:$true] %s175
          %178 = dma.hbm_to_vmem [thread:$0]  %s173, 512, %s176, %s161
        $region24: #{tpu_custom_call.1} parent=19 // pred_fallthru
          _
      $region20: #{tpu_custom_call.1} parent=5 // pred_fallthru
        _
      %p179 = scmp.le.s32.totalorder 1, %s15
      %p180 = scmp.lt.s32.totalorder %s15, 4
      %p181 = pnand %p179, %p180
      %p182 = pneg %p181
      // Predicated region
      $region25: #{tpu_custom_call.1} parent=5 // pred_check
        _
      $region26: #{tpu_custom_call.1} parent=5 // pred_check_branch
        %184 = sbr.rel (%p181) target = $region28
      $region27: #{tpu_custom_call.1} parent=5 // pred_region
        %s185 = ssub.s32 %s15, 1
        // Predicated region
        $region29: #{tpu_custom_call.1} parent=27 // pred_check
          %p186 = pneg %p62
        $region30: #{tpu_custom_call.1} parent=27 // pred_check_branch
          %188 = sbr.rel (%p186) target = $region32
        $region31: #{tpu_custom_call.1} parent=27 // pred_region
          %189 = dma.done [#allocation3], 512
        $region32: #{tpu_custom_call.1} parent=27 // pred_fallthru
          _
        %s190 = sand.u32 %s79, 1
        %s191 = scalar_lea.sflag [#allocation6], %s190
        %s192 = sand.u32 %s79, 1
        %s193 = smul.addr %s192, 32
        %s194 = scalar_lea.vmem [#allocation5], %s193
        // Predicated region
        $region33: #{tpu_custom_call.1} parent=27 // pred_check
          %p195 = pneg %p92
        $region34: #{tpu_custom_call.1} parent=27 // pred_check_branch
          %197 = sbr.rel (%p195) target = $region36
        $region35: #{tpu_custom_call.1} parent=27 // pred_region
          %198 = dma.done %s191, 512
        $region36: #{tpu_custom_call.1} parent=27 // pred_fallthru
          _
        %p199 = pneg %p62
        %p200 = pneg %p59
        %s201 = sand.u32 %s79, 1
        %s202 = scalar_lea.sflag [#allocation6], %s201
        %s203 = sand.u32 %s79, 1
        %s204 = smul.addr %s203, 32
        %s205 = scalar_lea.vmem [#allocation5], %s204
        %p206 = pneg %p92
        %p207 = pneg %p89
        %p208 = pneg %p122
        %p209 = pneg %p119
        %s210 = sand.u32 %s109, 1
        %s211 = scalar_lea.sflag [#allocation4], %s210
        %s212 = sand.u32 %s109, 1
        %s213 = smul.addr %s212, 32
        %s214 = scalar_lea.vmem [#allocation7], %s213
        %s215 = smul.u32 4, %s26
        %s216 = sadd.s32 %s27, %s26
        %s217 = smul.u32 4, %s216
        %s218 = sadd.s32 %s27, %s26
        %s219 = smul.u32 4, %s218
        %v220 = vld [vmem:[#allocation2] sm:$0xff]
        %v221 = vld [vmem:[#allocation2 + $0x8] sm:$0xff]
        %v222 = vld [vmem:[#allocation2 + $0x10] sm:$0xff]
        %v223 = vld [vmem:[#allocation2 + $0x18] sm:$0xff]
        %vm224 = vcmp.ge.s32.totalorder %v220, 1073741824
        %vm225 = vcmp.ge.s32.totalorder %v221, 1073741824
        %vm226 = vcmp.ge.s32.totalorder %v222, 1073741824
        %vm227 = vcmp.ge.s32.totalorder %v223, 1073741824
        %v228 = vld [vmem:[%s194] sm:$0xff]
        %v229 = vld [vmem:[%s194 + $0x8] sm:$0xff]
        %v230 = vld [vmem:[%s194 + $0x10] sm:$0xff]
        %v231 = vld [vmem:[%s194 + $0x18] sm:$0xff]
        %v232 = vsel %vm224, %v228, 0.0
        %v233 = vsel %vm225, %v229, 0.0
        %v234 = vsel %vm226, %v230, 0.0
        %v235 = vsel %vm227, %v231, 0.0
        %236 = vst [vmem:[%s214] sm:$0xff] %v232
        %237 = vst [vmem:[%s214 + $0x8] sm:$0xff] %v233
        %238 = vst [vmem:[%s214 + $0x10] sm:$0xff] %v234
        %239 = vst [vmem:[%s214 + $0x18] sm:$0xff] %v235
        %s240 = sand.u32 %s109, 1
        %s241 = scalar_lea.sflag [#allocation4], %s240
        %s242 = sand.u32 %s109, 1
        %s243 = smul.addr %s242, 32
        %s244 = scalar_lea.vmem [#allocation7], %s243
        // Predicated region
        $region37: #{tpu_custom_call.1} parent=27 // pred_check
          %p245 = pneg %p119
        $region38: #{tpu_custom_call.1} parent=27 // pred_check_branch
          %247 = sbr.rel (%p245) target = $region40
        $region39: #{tpu_custom_call.1} parent=27 // pred_region
          %s248 = sadd.s32 %s27, %s26
          %s249 = smul.u32 4, %s248
          %s251 = ssub.s32 512, 512
          %252 = vsyncadd %s241, %s251
          %s253 = smul.addr %s25, 12
          %s254 = sadd.s32 %s249, %s253
          %s255 = smul.addr %s254, 128
          %s256 = scalar_lea.hbm %s2, %s255
          %s258 = sshll.u32 %s244, 4
          %s259 = int_to_ptr.vmem [resolvable:$true] %s258
          %261 = dma.vmem_to_hbm [thread:$0]  %s259, 512, %s256, %s241
        $region40: #{tpu_custom_call.1} parent=27 // pred_fallthru
          _
      $region28: #{tpu_custom_call.1} parent=5 // pred_fallthru
        _
      %p262 = scmp.le.s32.totalorder 2, %s15
      // Predicated region
      $region41: #{tpu_custom_call.1} parent=5 // pred_check
        %p263 = pneg %p262
      $region42: #{tpu_custom_call.1} parent=5 // pred_check_branch
        %265 = sbr.rel (%p263) target = $region44
      $region43: #{tpu_custom_call.1} parent=5 // pred_region
        %s266 = ssub.s32 %s15, 2
        // Predicated region
        $region45: #{tpu_custom_call.1} parent=43 // pred_check
          %p267 = pneg %p125
        $region46: #{tpu_custom_call.1} parent=43 // pred_check_branch
          %269 = sbr.rel (%p267) target = $region48
        $region47: #{tpu_custom_call.1} parent=43 // pred_region
          %s270 = sand.u32 %s110, 1
          %s271 = scalar_lea.sflag [#allocation4], %s270
          %s272 = sand.u32 %s110, 1
          %s273 = smul.addr %s272, 32
          %s274 = scalar_lea.vmem [#allocation7], %s273
          %275 = dma.done %s271, 512
        $region48: #{tpu_custom_call.1} parent=43 // pred_fallthru
          _
      $region44: #{tpu_custom_call.1} parent=5 // pred_fallthru
        _
    $region6: #{tpu_custom_call.1} parent=1 // loop_footer
      %s19 = sadd.s32 1, %s15
    $region7: #{tpu_custom_call.1} parent=1 // loop_footer_branch
      %14 = sbr.rel target = $region3
    $region8: #{tpu_custom_call.1} parent=1 // loop_exit
      _
    %276 = vsyncpa [#allocation3], 1
    %s277 = scalar_lea.sflag [#allocation3], 1
    %278 = vsyncpa %s277, 1
    %279 = vsyncpa [#allocation6], 1
    %s280 = scalar_lea.sflag [#allocation6], 1
    %281 = vsyncpa %s280, 1
    %282 = vsyncpa [#allocation4], 1
    %s283 = scalar_lea.sflag [#allocation4], 1
    %284 = vsyncpa %s283, 1

</llo_original>
